<compile_context>
chip_gen: v5e
topology: v5e:2x2
jax: 0.10.0
libtpu: 0.0.40
codegen_flags: <defaults>
</compile_context>

<pallas_src>
import functools

import jax
import jax.numpy as jnp
from jax import lax
from jax.experimental import pallas as pl
from jax.experimental.pallas import tpu as pltpu

BRANCH_INPUT = 100
TRUNK_INPUT = 1
NUM_P = 40
NUM_HIDDEN_LAYER = 2
NUM_NEURON = 40

_PAD = 128  # padded feature / layer width (one vreg lane group)


def _deeponet_kernel(x_ref, w_ref, out_ref, *, num_layers, num_p,
                     compute_dtype):
    """Forward pass for one batch tile.

    x_ref  : (TB, 128)            batch-major padded input; lane `in_feat` = 1.0
    w_ref  : (num_layers, 128, 128) packed weights (biases folded in)
    out_ref: (1, TB)              f32, lane-dense store
    """
    x = x_ref[...]                                       # (TB, 128) compute_dtype

    # Layer 0: contract the lane (feature) axis of the batch-major tile.
    # Result is feature-major (128, TB); Mosaic handles the small operand
    # transpose in VMEM on the XLU (no HBM round-trip).
    h = lax.dot_general(
        w_ref[0], x,
        dimension_numbers=(((1,), (1,)), ((), ())),
        preferred_element_type=jnp.float32)              # (128, TB) f32
    h = jnp.maximum(h, 0.0)

    # Hidden layers: block-diagonal fused branch/trunk, bias via the ones row.
    for li in range(1, num_layers - 1):
        h = jnp.dot(w_ref[li], h.astype(compute_dtype),
                    preferred_element_type=jnp.float32)
        h = jnp.maximum(h, 0.0)

    # Output layer (no ReLU).
    out = jnp.dot(w_ref[num_layers - 1], h.astype(compute_dtype),
                  preferred_element_type=jnp.float32)    # (128, TB) f32

    # branch . trunk reduction over the sublane axis; lane-dense (1, TB) store.
    o1 = out[:num_p, :]
    o2 = out[num_p:2 * num_p, :]
    out_ref[...] = jnp.sum(o1 * o2, axis=0, keepdims=True).astype(out_ref.dtype)


def init_deeponet_params(key,
                         branch_input=BRANCH_INPUT,
                         trunk_input=TRUNK_INPUT,
                         num_p=NUM_P,
                         num_hidden_layer=NUM_HIDDEN_LAYER,
                         num_neuron=NUM_NEURON):
    """PyTorch-Linear-style uniform fan-in init; weights stored (in, out)."""
    dims_branch = ([(branch_input, num_neuron)]
                   + [(num_neuron, num_neuron)] * num_hidden_layer
                   + [(num_neuron, num_p)])
    dims_trunk = ([(trunk_input, num_neuron)]
                  + [(num_neuron, num_neuron)] * num_hidden_layer
                  + [(num_neuron, num_p)])

    params = []
    for (fan_in, fan_out) in dims_branch + dims_trunk:
        key, kw, kb = jax.random.split(key, 3)
        bound = 1.0 / jnp.sqrt(jnp.asarray(fan_in, jnp.float32))
        w = jax.random.uniform(kw, (fan_in, fan_out), jnp.float32, -bound, bound)
        b = jax.random.uniform(kb, (1, fan_out), jnp.float32, -bound, bound)
        params.append(w)
        params.append(b)
    return params


def _pack_weight_slab(params, *, branch_input, trunk_input, num_p,
                      num_hidden_layer, num_neuron, compute_dtype):
    """Pack all linears into one (L, 128, 128) feature-major slab.

    Branch/trunk fused block-diagonally; biases folded in via a constant ones
    lane (input lane `in_feat`) / ones row (activation row 2H).
    """
    n_lin = 2 + num_hidden_layer
    bp, tp = params[:2 * n_lin], params[2 * n_lin:]
    H, P = num_neuron, num_p
    in_feat = branch_input + trunk_input
    ones_col = in_feat          # input lane carrying the constant 1.0
    ones_row = 2 * H            # activation row carrying the constant 1.0

    def wT(w):                  # (in, out) -> (out, in)
        return w.T.astype(jnp.float32)

    def brow(b):                # (1, out) -> (out,)
        return b.reshape(-1).astype(jnp.float32)

    slabs = []

    # Input layer: branch uses lanes [0, branch_input), trunk uses
    # [branch_input, in_feat); bias comes from lane `ones_col`.
    w0 = jnp.zeros((_PAD, _PAD), jnp.float32)
    w0 = w0.at[:H, :branch_input].set(wT(bp[0]))
    w0 = w0.at[:H, ones_col].set(brow(bp[1]))
    w0 = w0.at[H:2 * H, branch_input:in_feat].set(wT(tp[0]))
    w0 = w0.at[H:2 * H, ones_col].set(brow(tp[1]))
    w0 = w0.at[ones_row, ones_col].set(1.0)      # propagate the constant 1
    slabs.append(w0)

    # Hidden layers: block-diagonal, bias from activation row `ones_row`.
    for li in range(1, 1 + num_hidden_layer):
        w = jnp.zeros((_PAD, _PAD), jnp.float32)
        w = w.at[:H, :H].set(wT(bp[2 * li]))
        w = w.at[:H, ones_row].set(brow(bp[2 * li + 1]))
        w = w.at[H:2 * H, H:2 * H].set(wT(tp[2 * li]))
        w = w.at[H:2 * H, ones_row].set(brow(tp[2 * li + 1]))
        w = w.at[ones_row, ones_row].set(1.0)
        slabs.append(w)

    # Output layer (no ReLU downstream, no ones row needed).
    lo = 1 + num_hidden_layer
    w = jnp.zeros((_PAD, _PAD), jnp.float32)
    w = w.at[:P, :H].set(wT(bp[2 * lo]))
    w = w.at[:P, ones_row].set(brow(bp[2 * lo + 1]))
    w = w.at[P:2 * P, H:2 * H].set(wT(tp[2 * lo]))
    w = w.at[P:2 * P, ones_row].set(brow(tp[2 * lo + 1]))
    slabs.append(w)

    return jnp.stack(slabs, axis=0).astype(compute_dtype)   # (L, 128, 128)


def _round_up(a, m):
    return ((a + m - 1) // m) * m


def deeponet_forward(x, params,
                     branch_input=BRANCH_INPUT,
                     trunk_input=TRUNK_INPUT,
                     num_p=NUM_P,
                     num_hidden_layer=NUM_HIDDEN_LAYER,
                     num_neuron=NUM_NEURON,
                     batch_tile=None,
                     compute_dtype=jnp.bfloat16):
    B, F = x.shape
    in_feat = branch_input + trunk_input
    assert F == in_feat
    # TODO(synk): the single 128-wide slab assumes in_feat+1 <= 128 and
    # 2*num_neuron+1, 2*num_p <= 128; wider nets need a multi-tile slab.
    assert in_feat + 1 <= _PAD and 2 * num_neuron + 1 <= _PAD and 2 * num_p <= _PAD

    cdt = jnp.dtype(compute_dtype)
    num_layers = 2 + num_hidden_layer

    # Batch tile: multiple of 128 (lane-dense stores), large enough to
    # amortize the ~0.35us per-step overhead, >=2 grid steps when B allows
    # (v7x megacore), capped at 2048 rows (fits v5e's 16 MiB scoped VMEM
    # when double-buffered).
    if batch_tile is None:
        batch_tile = max(128, min(2048, _round_up((B + 1) // 2, 128)))
    assert batch_tile % 128 == 0
    b_pad = _round_up(B, batch_tile)
    num_tiles = b_pad // batch_tile

    # Single wrapper pass over x: batch-major, features zero-padded to 128
    # lanes, constant-1.0 lane appended (folds all biases into the matmuls),
    # batch zero-padded up to a multiple of batch_tile.
    xin = jnp.zeros((b_pad, _PAD), cdt)
    xin = xin.at[:B, :in_feat].set(x.astype(cdt))
    xin = xin.at[:B, in_feat].set(1.0)

    w_slab = _pack_weight_slab(
        params, branch_input=branch_input, trunk_input=trunk_input,
        num_p=num_p, num_hidden_layer=num_hidden_layer,
        num_neuron=num_neuron, compute_dtype=cdt)

    kernel = functools.partial(
        _deeponet_kernel, num_layers=num_layers, num_p=num_p,
        compute_dtype=cdt)

    out = pl.pallas_call(
        kernel,
        out_shape=jax.ShapeDtypeStruct((1, b_pad), jnp.float32),
        grid_spec=pltpu.PrefetchScalarGridSpec(
            num_scalar_prefetch=0,
            grid=(num_tiles,),
            in_specs=[
                pl.BlockSpec((batch_tile, _PAD), lambda i: (i, 0)),
                pl.BlockSpec(w_slab.shape, lambda i: (0, 0, 0)),
            ],
            out_specs=pl.BlockSpec((1, batch_tile), lambda i: (0, i)),
        ),
        compiler_params=pltpu.CompilerParams(
            dimension_semantics=("parallel",),
            vmem_limit_bytes=32 << 20),
    )(xin, w_slab)

    return out[0, :B].reshape(B, 1)


def deeponet_reference(x, params,
                       branch_input=BRANCH_INPUT,
                       trunk_input=TRUNK_INPUT,
                       num_hidden_layer=NUM_HIDDEN_LAYER):
    """Pure-JAX reference mirroring the PyTorch forward (batch-major, f32)."""
    n_lin = 2 + num_hidden_layer
    branch_p = params[: 2 * n_lin]
    trunk_p = params[2 * n_lin:]

    def run(inp, ps):
        h = inp
        for li in range(n_lin):
            w, b = ps[2 * li], ps[2 * li + 1]
            h = h @ w + b
            if li < n_lin - 1:
                h = jnp.maximum(h, 0.0)
        return h

    xb = x[:, :branch_input]
    xt = x[:, branch_input:branch_input + trunk_input]
    o1 = run(xb, branch_p)
    o2 = run(xt, trunk_p)
    return jnp.sum(o1 * o2, axis=-1, keepdims=True)


if __name__ == "__main__":
    key = jax.random.PRNGKey(0)
    k_params, k_x1, k_x2 = jax.random.split(key, 3)

    params = init_deeponet_params(k_params)

    # f32 path, B=256 -> default tile 128, 2-step "parallel" grid
    # (exercises pipelining, lane-dense 128-wide stores, v7x sharding).
    B = 256
    x = jax.random.normal(k_x1, (B, BRANCH_INPUT + TRUNK_INPUT), jnp.float32)
    ref = deeponet_reference(x, params)

    fwd_f32 = jax.jit(lambda xx, pp: deeponet_forward(
        xx, pp, compute_dtype=jnp.float32))
    out = jax.block_until_ready(fwd_f32(x, params))
    assert out.shape == (B, 1)
    err = float(jnp.max(jnp.abs(out - ref)))
    assert jnp.allclose(out, ref, atol=1e-3, rtol=1e-3), f"f32 mismatch: {err}"

    # Default bf16 path (f32 accumulation) with a non-multiple-of-128 batch
    # (exercises the wrapper-side batch padding), loose tolerance.
    B2 = 200
    x2 = jax.random.normal(k_x2, (B2, BRANCH_INPUT + TRUNK_INPUT), jnp.float32)
    ref2 = deeponet_reference(x2, params)

    fwd_bf16 = jax.jit(deeponet_forward)
    out2 = jax.block_until_ready(fwd_bf16(x2, params))
    assert out2.shape == (B2, 1)
    scale = float(jnp.max(jnp.abs(ref2))) + 1e-3
    bf_err = float(jnp.max(jnp.abs(out2 - ref2)))
    assert bf_err < 0.05 * scale + 1e-3, f"bf16 mismatch: {bf_err} (scale {scale})"

    print("KERNEL_OK")
</pallas_src>

<mosaic_0001>
module attributes {stable_mosaic.version = 11 : i64} {
  func.func @_deeponet_kernel(%arg0: i32, %arg1: memref<128x128xf32, #tpu.memory_space<vmem>>, %arg2: memref<4x128x128xf32, #tpu.memory_space<vmem>>, %arg3: memref<1x128xf32, #tpu.memory_space<vmem>>) attributes {dimension_semantics = [#tpu.dimension_semantics<parallel>], iteration_bounds = array<i64: 2>, scalar_prefetch = 0 : i64, scratch_operands = 0 : i64, tpu.core_type = #tpu.core_type<tc>, window_params = [{transform_indices = @transform_0, window_bounds = array<i64: 128, 128>}, {pipeline_mode = #tpu.pipeline_mode<synchronous>, transform_indices = @transform_1, window_bounds = array<i64: 4, 128, 128>}, {transform_indices = @transform_2, window_bounds = array<i64: 1, 128>}]} {
    %c0 = arith.constant 0 : index
    %c0_0 = arith.constant 0 : index
    %0 = vector.load %arg1[%c0, %c0_0] : memref<128x128xf32, #tpu.memory_space<vmem>>, vector<128x128xf32>
    %c0_1 = arith.constant 0 : index
    %c0_2 = arith.constant 0 : index
    %c0_3 = arith.constant 0 : index
    %1 = vector.load %arg2[%c0_1, %c0_2, %c0_3] : memref<4x128x128xf32, #tpu.memory_space<vmem>>, vector<1x128x128xf32>
    %2 = vector.shape_cast %1 : vector<1x128x128xf32> to vector<128x128xf32>
    %cst = arith.constant dense<0.000000e+00> : vector<128x128xf32>
    %3 = tpu.matmul %2, %0, %cst {dimension_numbers = #tpu.dot_dimension_numbers<[1], [1], [0], [0], [0, 0, 1, 0], [], []>} : vector<128x128xf32>, vector<128x128xf32>, vector<128x128xf32> -> vector<128x128xf32>
    %cst_4 = arith.constant 0.000000e+00 : f32
    %4 = vector.broadcast %cst_4 : f32 to vector<128x128xf32>
    %5 = arith.maximumf %3, %4 : vector<128x128xf32>
    %c1 = arith.constant 1 : index
    %c0_5 = arith.constant 0 : index
    %c0_6 = arith.constant 0 : index
    %6 = vector.load %arg2[%c1, %c0_5, %c0_6] : memref<4x128x128xf32, #tpu.memory_space<vmem>>, vector<1x128x128xf32>
    %7 = vector.shape_cast %6 : vector<1x128x128xf32> to vector<128x128xf32>
    %cst_7 = arith.constant dense<0.000000e+00> : vector<128x128xf32>
    %8 = tpu.matmul %7, %5, %cst_7 {dimension_numbers = #tpu.dot_dimension_numbers<[1], [0], [0], [1], [0, 0, 1, 1], [], []>} : vector<128x128xf32>, vector<128x128xf32>, vector<128x128xf32> -> vector<128x128xf32>
    %cst_8 = arith.constant 0.000000e+00 : f32
    %9 = vector.broadcast %cst_8 : f32 to vector<128x128xf32>
    %10 = arith.maximumf %8, %9 : vector<128x128xf32>
    %c2 = arith.constant 2 : index
    %c0_9 = arith.constant 0 : index
    %c0_10 = arith.constant 0 : index
    %11 = vector.load %arg2[%c2, %c0_9, %c0_10] : memref<4x128x128xf32, #tpu.memory_space<vmem>>, vector<1x128x128xf32>
    %12 = vector.shape_cast %11 : vector<1x128x128xf32> to vector<128x128xf32>
    %cst_11 = arith.constant dense<0.000000e+00> : vector<128x128xf32>
    %13 = tpu.matmul %12, %10, %cst_11 {dimension_numbers = #tpu.dot_dimension_numbers<[1], [0], [0], [1], [0, 0, 1, 1], [], []>} : vector<128x128xf32>, vector<128x128xf32>, vector<128x128xf32> -> vector<128x128xf32>
    %cst_12 = arith.constant 0.000000e+00 : f32
    %14 = vector.broadcast %cst_12 : f32 to vector<128x128xf32>
    %15 = arith.maximumf %13, %14 : vector<128x128xf32>
    %c3 = arith.constant 3 : index
    %c0_13 = arith.constant 0 : index
    %c0_14 = arith.constant 0 : index
    %16 = vector.load %arg2[%c3, %c0_13, %c0_14] : memref<4x128x128xf32, #tpu.memory_space<vmem>>, vector<1x128x128xf32>
    %17 = vector.shape_cast %16 : vector<1x128x128xf32> to vector<128x128xf32>
    %cst_15 = arith.constant dense<0.000000e+00> : vector<128x128xf32>
    %18 = tpu.matmul %17, %15, %cst_15 {dimension_numbers = #tpu.dot_dimension_numbers<[1], [0], [0], [1], [0, 0, 1, 1], [], []>} : vector<128x128xf32>, vector<128x128xf32>, vector<128x128xf32> -> vector<128x128xf32>
    %19 = vector.extract_strided_slice %18 {offsets = [0, 0], sizes = [40, 128], strides = [1, 1]} : vector<128x128xf32> to vector<40x128xf32>
    %20 = vector.extract_strided_slice %18 {offsets = [40, 0], sizes = [40, 128], strides = [1, 1]} : vector<128x128xf32> to vector<40x128xf32>
    %21 = arith.mulf %19, %20 : vector<40x128xf32>
    %cst_16 = arith.constant dense<0.000000e+00> : vector<128xf32>
    %22 = vector.multi_reduction <add>, %21, %cst_16 [0] : vector<40x128xf32> to vector<128xf32>
    %23 = vector.shape_cast %22 : vector<128xf32> to vector<1x128xf32>
    %c0_17 = arith.constant 0 : index
    %c0_18 = arith.constant 0 : index
    %24 = vector.load %arg3[%c0_17, %c0_18] : memref<1x128xf32, #tpu.memory_space<vmem>>, vector<1x128xf32>
    tpu.vector_store %arg3[%c0_17, %c0_18], %23 {strides = array<i32>} : memref<1x128xf32, #tpu.memory_space<vmem>>, vector<1x128xf32>,
    return
  }
  func.func @transform_0(%arg0: i32) -> (i32, i32) {
    %c0_i32 = arith.constant 0 : i32
    %c0_i32_0 = arith.constant 0 : i32
    return %arg0, %c0_i32 : i32, i32
  }
  func.func @transform_1(%arg0: i32) -> (i32, i32, i32) {
    %c0_i32 = arith.constant 0 : i32
    %c0_i32_0 = arith.constant 0 : i32
    %c0_i32_1 = arith.constant 0 : i32
    %c0_i32_2 = arith.constant 0 : i32
    return %c0_i32, %c0_i32_0, %c0_i32_1 : i32, i32, i32
  }
  func.func @transform_2(%arg0: i32) -> (i32, i32) {
    %c0_i32 = arith.constant 0 : i32
    %c0_i32_0 = arith.constant 0 : i32
    return %c0_i32, %arg0 : i32, i32
  }
}

</mosaic_0001>

<llo_original>
// kernel: _lambda_.1
$region0: #{_lambda_.1}
  #allocation0 [shape = 'u32[]', space=smem, size = 0x4, offset = 0x4, fixed_abs, tag = 'smem constant byte address 0x4 - core index']
  #allocation1 [shape = 'u32[72,128]{1,0:T(1,128)}', space=vmem, size = 0x9000, scoped, tag = 'internal scratch']
  %s0 = inlined_call_operand.vmem [shape: f32[256,128], index: 0, kind: input, shape index: {}]
  %s1 = inlined_call_operand.vmem [shape: f32[4,128,128], index: 1, kind: input, shape index: {}]
  %s2 = inlined_call_operand.hbm [shape: f32[1,256], index: 2, kind: output, shape index: {}]
  %s3 = sld [smem:[#allocation0]]
  $region41: #{_lambda_.1} parent=0
    _
  %s5 = ssub.s32 1, %s3
  %s6 = scalar_select 0, %s5, %s3
  $region1: #{_lambda_.1} parent=0
    #allocation2 [shape = 'u8[1024]{0}', space=vmem, size = 0x400, scoped, tag = 'output window, operand 0']
    #allocation3 [shape = 's32[2]{0}', space=sflag, size = 0x8, scoped, tag = 'scoped memory for _lambda_.1']
    %7 = vsyncpa [#allocation3], 0
    %s8 = scalar_lea.sflag [#allocation3], 1
    %9 = vsyncpa %s8, 0
    loop: start=0, step=1, limit=4
    $region2: #{_lambda_.1} parent=1 // loop_pre_header
      _
    $region3: #{_lambda_.1} parent=1 // loop_header
      %s11 = sphi 0, %s15
      %p12 = scmp.ge.s32.totalorder %s11, 4
      %s21 = sphi 0, %s23
      %s24 = sphi 0, %s21
      %s25 = sphi 0, %s24
      %s41 = sphi 0, %s25
      %s45 = sphi 0, %s45
      %s47 = sphi 0, %s45
      %s48 = sphi 0, %s47
      %s62 = sphi 0, %s48
      %s68 = sphi 0, %s70
      %s71 = sphi 0, %s68
      %s72 = sphi 0, %s71
      %s88 = sphi 0, %s72
    $region4: #{_lambda_.1} parent=1 // loop_header_branch
      %14 = sbr.rel (%p12) target = $region8
    $region5: #{_lambda_.1} parent=1 // loop_body
      %s16 = ssub.s32 %s11, 1
      %s17 = ssub.s32 %s11, 2
      %s18 = sadd.s32 %s11, 1
      %s19 = ssub.s32 %s11, %s18
      %p20 = scmp.eq.s32.totalorder %s19, 0
      %s22 = sadd.s32 %s21, 1
      %s23 = scalar_select %p20, %s21, %s22
      %p26 = pneg %p20
      %p27 = scmp.eq.s32.totalorder %s11, 1
      %p28 = por %p26, %p27
      %p29 = scmp.ne.s32.totalorder %s21, %s24
      %p30 = scmp.eq.s32.totalorder %s11, 0
      %p31 = por %p29, %p30
      %p32 = scmp.ne.s32.totalorder %s21, %s24
      %p33 = scmp.eq.s32.totalorder %s16, 1
      %p34 = por %p32, %p33
      %p35 = scmp.ne.s32.totalorder %s24, %s25
      %p36 = scmp.eq.s32.totalorder %s16, 0
      %p37 = por %p35, %p36
      %p38 = scmp.ne.s32.totalorder %s24, %s25
      %p39 = scmp.eq.s32.totalorder %s17, 1
      %p40 = por %p38, %p39
      %p42 = scmp.ne.s32.totalorder %s25, %s41
      %p43 = scmp.eq.s32.totalorder %s17, 0
      %p44 = por %p42, %p43
      %s46 = sadd.s32 %s45, 1
      %p49 = scmp.eq.s32.totalorder %s11, 1
      %p50 = scmp.ne.s32.totalorder %s45, %s47
      %p51 = scmp.eq.s32.totalorder %s11, 0
      %p52 = por %p50, %p51
      %p53 = scmp.ne.s32.totalorder %s45, %s47
      %p54 = scmp.eq.s32.totalorder %s16, 1
      %p55 = por %p53, %p54
      %p56 = scmp.ne.s32.totalorder %s47, %s48
      %p57 = scmp.eq.s32.totalorder %s16, 0
      %p58 = por %p56, %p57
      %p59 = scmp.ne.s32.totalorder %s47, %s48
      %p60 = scmp.eq.s32.totalorder %s17, 1
      %p61 = por %p59, %p60
      %p63 = scmp.ne.s32.totalorder %s48, %s62
      %p64 = scmp.eq.s32.totalorder %s17, 0
      %p65 = por %p63, %p64
      %s66 = ssub.s32 %s11, %s18
      %p67 = scmp.eq.s32.totalorder %s66, 0
      %s69 = sadd.s32 %s68, 1
      %s70 = scalar_select %p67, %s68, %s69
      %p73 = pneg %p67
      %p74 = scmp.eq.s32.totalorder %s11, 1
      %p75 = por %p73, %p74
      %p76 = scmp.ne.s32.totalorder %s68, %s71
      %p77 = scmp.eq.s32.totalorder %s11, 0
      %p78 = por %p76, %p77
      %p79 = scmp.ne.s32.totalorder %s68, %s71
      %p80 = scmp.eq.s32.totalorder %s16, 1
      %p81 = por %p79, %p80
      %p82 = scmp.ne.s32.totalorder %s71, %s72
      %p83 = scmp.eq.s32.totalorder %s16, 0
      %p84 = por %p82, %p83
      %p85 = scmp.ne.s32.totalorder %s71, %s72
      %p86 = scmp.eq.s32.totalorder %s17, 1
      %p87 = por %p85, %p86
      %p89 = scmp.ne.s32.totalorder %s72, %s88
      %p90 = scmp.eq.s32.totalorder %s17, 0
      %p91 = por %p89, %p90
      %p92 = scmp.le.s32.totalorder 1, %s11
      %p93 = scmp.lt.s32.totalorder %s11, 3
      %p94 = pnand %p92, %p93
      %p95 = pneg %p94
      // Predicated region
      $region9: #{_lambda_.1} parent=5 // pred_check
        _
      $region10: #{_lambda_.1} parent=5 // pred_check_branch
        %97 = sbr.rel (%p94) target = $region12
      $region11: #{_lambda_.1} parent=5 // pred_region
        %s98 = ssub.s32 %s11, 1
        // Predicated region
        $region13: #{_lambda_.1} parent=11 // pred_check
          %p99 = pneg %p58
        $region14: #{_lambda_.1} parent=11 // pred_check_branch
          %101 = sbr.rel (%p99) target = $region16
        $region15: #{_lambda_.1} parent=11 // pred_region
          _
        $region16: #{_lambda_.1} parent=11 // pred_fallthru
          _
      $region12: #{_lambda_.1} parent=5 // pred_fallthru
        _
      %p102 = scmp.lt.s32.totalorder %s11, 2
      // Predicated region
      $region17: #{_lambda_.1} parent=5 // pred_check
        %p103 = pneg %p102
      $region18: #{_lambda_.1} parent=5 // pred_check_branch
        %105 = sbr.rel (%p103) target = $region20
      $region19: #{_lambda_.1} parent=5 // pred_region
        // Predicated region
        $region21: #{_lambda_.1} parent=19 // pred_check
          %p106 = pneg %p31
        $region22: #{_lambda_.1} parent=19 // pred_check_branch
          %108 = sbr.rel (%p106) target = $region24
        $region23: #{_lambda_.1} parent=19 // pred_region
          %s109 = smul.u32 16, %s11
          %p110 = scmp.lt.s32.totalorder %s109, 31
          %s111 = scalar_select %p110, %s109, 31
          %s112 = smul.addr %s111, 8
          %s113 = scalar_lea.vmem %s0, %s112
          %s114 = smul.u32 16, %s11
        $region24: #{_lambda_.1} parent=19 // pred_fallthru
          _
      $region20: #{_lambda_.1} parent=5 // pred_fallthru
        _
      %p115 = scmp.le.s32.totalorder 1, %s11
      %p116 = scmp.lt.s32.totalorder %s11, 3
      %p117 = pnand %p115, %p116
      %p118 = pneg %p117
      // Predicated region
      $region25: #{_lambda_.1} parent=5 // pred_check
        _
      $region26: #{_lambda_.1} parent=5 // pred_check_branch
        %120 = sbr.rel (%p117) target = $region28
      $region27: #{_lambda_.1} parent=5 // pred_region
        %s121 = ssub.s32 %s11, 1
        %s122 = smul.u32 16, %s16
        %p123 = scmp.lt.s32.totalorder %s122, 31
        %s124 = scalar_select %p123, %s122, 31
        %s125 = smul.addr %s124, 8
        %s126 = scalar_lea.vmem %s0, %s125
        %p127 = pneg %p37
        %p128 = pneg %p34
        %p129 = pneg %p58
        %p130 = pneg %p55
        %p131 = pneg %p84
        %p132 = pneg %p81
        %s133 = sand.u32 %s71, 1
        %s134 = scalar_lea.sflag [#allocation3], %s133
        %s135 = sand.u32 %s71, 1
        %s136 = scalar_lea.vmem [#allocation2], %s135
        %s137 = smul.u32 16, %s16
        %p138 = scmp.lt.s32.totalorder %s137, 31
        %s139 = scalar_select %p138, %s137, 31
        %s140 = smul.addr %s139, 8
        %s141 = scalar_lea.vmem %s0, %s140
        %s142 = smul.u32 16, %s16
        %v143 = vld [vmem:[%s141] sm:$0xff]
        %v144 = vld [vmem:[%s141 + $0x8] sm:$0xff]
        %v145 = vld [vmem:[%s141 + $0x10] sm:$0xff]
        %v146 = vld [vmem:[%s141 + $0x18] sm:$0xff]
        %v147 = vld [vmem:[%s141 + $0x20] sm:$0xff]
        %v148 = vld [vmem:[%s141 + $0x28] sm:$0xff]
        %v149 = vld [vmem:[%s141 + $0x30] sm:$0xff]
        %v150 = vld [vmem:[%s141 + $0x38] sm:$0xff]
        %v151 = vld [vmem:[%s141 + $0x40] sm:$0xff]
        %v152 = vld [vmem:[%s141 + $0x48] sm:$0xff]
        %v153 = vld [vmem:[%s141 + $0x50] sm:$0xff]
        %v154 = vld [vmem:[%s141 + $0x58] sm:$0xff]
        %v155 = vld [vmem:[%s141 + $0x60] sm:$0xff]
        %v156 = vld [vmem:[%s141 + $0x68] sm:$0xff]
        %v157 = vld [vmem:[%s141 + $0x70] sm:$0xff]
        %v158 = vld [vmem:[%s141 + $0x78] sm:$0xff]
        %v159 = vld [vmem:[%s1] sm:$0xff]
        %v160 = vld [vmem:[%s1 + $0x8] sm:$0xff]
        %v161 = vld [vmem:[%s1 + $0x10] sm:$0xff]
        %v162 = vld [vmem:[%s1 + $0x18] sm:$0xff]
        %v163 = vld [vmem:[%s1 + $0x20] sm:$0xff]
        %v164 = vld [vmem:[%s1 + $0x28] sm:$0xff]
        %v165 = vld [vmem:[%s1 + $0x30] sm:$0xff]
        %v166 = vld [vmem:[%s1 + $0x38] sm:$0xff]
        %v167 = vld [vmem:[%s1 + $0x40] sm:$0xff]
        %v168 = vld [vmem:[%s1 + $0x48] sm:$0xff]
        %v169 = vld [vmem:[%s1 + $0x50] sm:$0xff]
        %v170 = vld [vmem:[%s1 + $0x58] sm:$0xff]
        %v171 = vld [vmem:[%s1 + $0x60] sm:$0xff]
        %v172 = vld [vmem:[%s1 + $0x68] sm:$0xff]
        %v173 = vld [vmem:[%s1 + $0x70] sm:$0xff]
        %v174 = vld [vmem:[%s1 + $0x78] sm:$0xff]
        %175 = vmatpush.xpose.msra.mxu0 %v158
        %176 = vmatpush.xpose.msra.mxu0 %v157
        %177 = vmatpush.xpose.msra.mxu0 %v156
        %178 = vmatpush.xpose.msra.mxu0 %v155
        %179 = vmatpush.xpose.msra.mxu0 %v154
        %180 = vmatpush.xpose.msra.mxu0 %v153
        %181 = vmatpush.xpose.msra.mxu0 %v152
        %182 = vmatpush.xpose.msra.mxu0 %v151
        %183 = vmatpush.xpose.msra.mxu0 %v150
        %184 = vmatpush.xpose.msra.mxu0 %v149
        %185 = vmatpush.xpose.msra.mxu0 %v148
        %186 = vmatpush.xpose.msra.mxu0 %v147
        %187 = vmatpush.xpose.msra.mxu0 %v146
        %188 = vmatpush.xpose.msra.mxu0 %v145
        %189 = vmatpush.xpose.msra.mxu0 %v144
        %190 = vmatpush.xpose.msra.mxu0 %v143
        %191 = vmatmul.f32.gmra.mxu0 %v159
        %v192 = vpop.f32.mrf.mxu0
        %v193 = vadd.f32 0.0, %v192
        %194 = vmatmul.f32.gmra.mxu0 %v160
        %v195 = vpop.f32.mrf.mxu0
        %v196 = vadd.f32 0.0, %v195
        %197 = vmatmul.f32.gmra.mxu0 %v161
        %v198 = vpop.f32.mrf.mxu0
        %v199 = vadd.f32 0.0, %v198
        %200 = vmatmul.f32.gmra.mxu0 %v162
        %v201 = vpop.f32.mrf.mxu0
        %v202 = vadd.f32 0.0, %v201
        %203 = vmatmul.f32.gmra.mxu0 %v163
        %v204 = vpop.f32.mrf.mxu0
        %v205 = vadd.f32 0.0, %v204
        %206 = vmatmul.f32.gmra.mxu0 %v164
        %v207 = vpop.f32.mrf.mxu0
        %v208 = vadd.f32 0.0, %v207
        %209 = vmatmul.f32.gmra.mxu0 %v165
        %v210 = vpop.f32.mrf.mxu0
        %v211 = vadd.f32 0.0, %v210
        %212 = vmatmul.f32.gmra.mxu0 %v166
        %v213 = vpop.f32.mrf.mxu0
        %v214 = vadd.f32 0.0, %v213
        %215 = vmatmul.f32.gmra.mxu0 %v167
        %v216 = vpop.f32.mrf.mxu0
        %v217 = vadd.f32 0.0, %v216
        %218 = vmatmul.f32.gmra.mxu0 %v168
        %v219 = vpop.f32.mrf.mxu0
        %v220 = vadd.f32 0.0, %v219
        %221 = vmatmul.f32.gmra.mxu0 %v169
        %v222 = vpop.f32.mrf.mxu0
        %v223 = vadd.f32 0.0, %v222
        %224 = vmatmul.f32.gmra.mxu0 %v170
        %v225 = vpop.f32.mrf.mxu0
        %v226 = vadd.f32 0.0, %v225
        %227 = vmatmul.f32.gmra.mxu0 %v171
        %v228 = vpop.f32.mrf.mxu0
        %v229 = vadd.f32 0.0, %v228
        %230 = vmatmul.f32.gmra.mxu0 %v172
        %v231 = vpop.f32.mrf.mxu0
        %v232 = vadd.f32 0.0, %v231
        %233 = vmatmul.f32.gmra.mxu0 %v173
        %v234 = vpop.f32.mrf.mxu0
        %v235 = vadd.f32 0.0, %v234
        %236 = vmatmul.f32.gmra.mxu0 %v174
        %v237 = vpop.f32.mrf.mxu0
        %v238 = vadd.f32 0.0, %v237
        %239 = vdwg.mxu0
        %v240 = vmax.f32 %v193, 0.0
        %v241 = vmax.f32 %v196, 0.0
        %v242 = vmax.f32 %v199, 0.0
        %v243 = vmax.f32 %v202, 0.0
        %v244 = vmax.f32 %v205, 0.0
        %v245 = vmax.f32 %v208, 0.0
        %v246 = vmax.f32 %v211, 0.0
        %v247 = vmax.f32 %v214, 0.0
        %v248 = vmax.f32 %v217, 0.0
        %v249 = vmax.f32 %v220, 0.0
        %v250 = vmax.f32 %v223, 0.0
        %v251 = vmax.f32 %v226, 0.0
        %v252 = vmax.f32 %v229, 0.0
        %v253 = vmax.f32 %v232, 0.0
        %v254 = vmax.f32 %v235, 0.0
        %v255 = vmax.f32 %v238, 0.0
        %s256 = scalar_lea.vmem %s1, 128
        %v257 = vld [vmem:[%s256] sm:$0xff]
        %v258 = vld [vmem:[%s256 + $0x8] sm:$0xff]
        %v259 = vld [vmem:[%s256 + $0x10] sm:$0xff]
        %v260 = vld [vmem:[%s256 + $0x18] sm:$0xff]
        %v261 = vld [vmem:[%s256 + $0x20] sm:$0xff]
        %v262 = vld [vmem:[%s256 + $0x28] sm:$0xff]
        %v263 = vld [vmem:[%s256 + $0x30] sm:$0xff]
        %v264 = vld [vmem:[%s256 + $0x38] sm:$0xff]
        %v265 = vld [vmem:[%s256 + $0x40] sm:$0xff]
        %v266 = vld [vmem:[%s256 + $0x48] sm:$0xff]
        %v267 = vld [vmem:[%s256 + $0x50] sm:$0xff]
        %v268 = vld [vmem:[%s256 + $0x58] sm:$0xff]
        %v269 = vld [vmem:[%s256 + $0x60] sm:$0xff]
        %v270 = vld [vmem:[%s256 + $0x68] sm:$0xff]
        %v271 = vld [vmem:[%s256 + $0x70] sm:$0xff]
        %v272 = vld [vmem:[%s256 + $0x78] sm:$0xff]
        %273 = vmatpush.msra.mxu0 %v255
        %274 = vmatpush.msra.mxu0 %v254
        %275 = vmatpush.msra.mxu0 %v253
        %276 = vmatpush.msra.mxu0 %v252
        %277 = vmatpush.msra.mxu0 %v251
        %278 = vmatpush.msra.mxu0 %v250
        %279 = vmatpush.msra.mxu0 %v249
        %280 = vmatpush.msra.mxu0 %v248
        %281 = vmatpush.msra.mxu0 %v247
        %282 = vmatpush.msra.mxu0 %v246
        %283 = vmatpush.msra.mxu0 %v245
        %284 = vmatpush.msra.mxu0 %v244
        %285 = vmatpush.msra.mxu0 %v243
        %286 = vmatpush.msra.mxu0 %v242
        %287 = vmatpush.msra.mxu0 %v241
        %288 = vmatpush.msra.mxu0 %v240
        %289 = vmatmul.f32.gmra.mxu0 %v257
        %v290 = vpop.f32.mrf.mxu0
        %v291 = vadd.f32 0.0, %v290
        %292 = vmatmul.f32.gmra.mxu0 %v258
        %v293 = vpop.f32.mrf.mxu0
        %v294 = vadd.f32 0.0, %v293
        %295 = vmatmul.f32.gmra.mxu0 %v259
        %v296 = vpop.f32.mrf.mxu0
        %v297 = vadd.f32 0.0, %v296
        %298 = vmatmul.f32.gmra.mxu0 %v260
        %v299 = vpop.f32.mrf.mxu0
        %v300 = vadd.f32 0.0, %v299
        %301 = vmatmul.f32.gmra.mxu0 %v261
        %v302 = vpop.f32.mrf.mxu0
        %v303 = vadd.f32 0.0, %v302
        %304 = vmatmul.f32.gmra.mxu0 %v262
        %v305 = vpop.f32.mrf.mxu0
        %v306 = vadd.f32 0.0, %v305
        %307 = vmatmul.f32.gmra.mxu0 %v263
        %v308 = vpop.f32.mrf.mxu0
        %v309 = vadd.f32 0.0, %v308
        %310 = vmatmul.f32.gmra.mxu0 %v264
        %v311 = vpop.f32.mrf.mxu0
        %v312 = vadd.f32 0.0, %v311
        %313 = vmatmul.f32.gmra.mxu0 %v265
        %v314 = vpop.f32.mrf.mxu0
        %v315 = vadd.f32 0.0, %v314
        %316 = vmatmul.f32.gmra.mxu0 %v266
        %v317 = vpop.f32.mrf.mxu0
        %v318 = vadd.f32 0.0, %v317
        %319 = vmatmul.f32.gmra.mxu0 %v267
        %v320 = vpop.f32.mrf.mxu0
        %v321 = vadd.f32 0.0, %v320
        %322 = vmatmul.f32.gmra.mxu0 %v268
        %v323 = vpop.f32.mrf.mxu0
        %v324 = vadd.f32 0.0, %v323
        %325 = vmatmul.f32.gmra.mxu0 %v269
        %v326 = vpop.f32.mrf.mxu0
        %v327 = vadd.f32 0.0, %v326
        %328 = vmatmul.f32.gmra.mxu0 %v270
        %v329 = vpop.f32.mrf.mxu0
        %v330 = vadd.f32 0.0, %v329
        %331 = vmatmul.f32.gmra.mxu0 %v271
        %v332 = vpop.f32.mrf.mxu0
        %v333 = vadd.f32 0.0, %v332
        %334 = vmatmul.f32.gmra.mxu0 %v272
        %v335 = vpop.f32.mrf.mxu0
        %v336 = vadd.f32 0.0, %v335
        %337 = vdwg.mxu0
        %v338 = vmax.f32 %v291, 0.0
        %v339 = vmax.f32 %v294, 0.0
        %v340 = vmax.f32 %v297, 0.0
        %v341 = vmax.f32 %v300, 0.0
        %v342 = vmax.f32 %v303, 0.0
        %v343 = vmax.f32 %v306, 0.0
        %v344 = vmax.f32 %v309, 0.0
        %v345 = vmax.f32 %v312, 0.0
        %v346 = vmax.f32 %v315, 0.0
        %v347 = vmax.f32 %v318, 0.0
        %v348 = vmax.f32 %v321, 0.0
        %v349 = vmax.f32 %v324, 0.0
        %v350 = vmax.f32 %v327, 0.0
        %v351 = vmax.f32 %v330, 0.0
        %v352 = vmax.f32 %v333, 0.0
        %v353 = vmax.f32 %v336, 0.0
        %s354 = scalar_lea.vmem %s1, 256
        %v355 = vld [vmem:[%s354] sm:$0xff]
        %v356 = vld [vmem:[%s354 + $0x8] sm:$0xff]
        %v357 = vld [vmem:[%s354 + $0x10] sm:$0xff]
        %v358 = vld [vmem:[%s354 + $0x18] sm:$0xff]
        %v359 = vld [vmem:[%s354 + $0x20] sm:$0xff]
        %v360 = vld [vmem:[%s354 + $0x28] sm:$0xff]
        %v361 = vld [vmem:[%s354 + $0x30] sm:$0xff]
        %v362 = vld [vmem:[%s354 + $0x38] sm:$0xff]
        %v363 = vld [vmem:[%s354 + $0x40] sm:$0xff]
        %v364 = vld [vmem:[%s354 + $0x48] sm:$0xff]
        %v365 = vld [vmem:[%s354 + $0x50] sm:$0xff]
        %v366 = vld [vmem:[%s354 + $0x58] sm:$0xff]
        %v367 = vld [vmem:[%s354 + $0x60] sm:$0xff]
        %v368 = vld [vmem:[%s354 + $0x68] sm:$0xff]
        %v369 = vld [vmem:[%s354 + $0x70] sm:$0xff]
        %v370 = vld [vmem:[%s354 + $0x78] sm:$0xff]
        %371 = vmatpush.msra.mxu0 %v353
        %372 = vmatpush.msra.mxu0 %v352
        %373 = vmatpush.msra.mxu0 %v351
        %374 = vmatpush.msra.mxu0 %v350
        %375 = vmatpush.msra.mxu0 %v349
        %376 = vmatpush.msra.mxu0 %v348
        %377 = vmatpush.msra.mxu0 %v347
        %378 = vmatpush.msra.mxu0 %v346
        %379 = vmatpush.msra.mxu0 %v345
        %380 = vmatpush.msra.mxu0 %v344
        %381 = vmatpush.msra.mxu0 %v343
        %382 = vmatpush.msra.mxu0 %v342
        %383 = vmatpush.msra.mxu0 %v341
        %384 = vmatpush.msra.mxu0 %v340
        %385 = vmatpush.msra.mxu0 %v339
        %386 = vmatpush.msra.mxu0 %v338
        %387 = vmatmul.f32.gmra.mxu0 %v355
        %v388 = vpop.f32.mrf.mxu0
        %v389 = vadd.f32 0.0, %v388
        %390 = vmatmul.f32.gmra.mxu0 %v356
        %v391 = vpop.f32.mrf.mxu0
        %v392 = vadd.f32 0.0, %v391
        %393 = vmatmul.f32.gmra.mxu0 %v357
        %v394 = vpop.f32.mrf.mxu0
        %v395 = vadd.f32 0.0, %v394
        %396 = vmatmul.f32.gmra.mxu0 %v358
        %v397 = vpop.f32.mrf.mxu0
        %v398 = vadd.f32 0.0, %v397
        %399 = vmatmul.f32.gmra.mxu0 %v359
        %v400 = vpop.f32.mrf.mxu0
        %v401 = vadd.f32 0.0, %v400
        %402 = vmatmul.f32.gmra.mxu0 %v360
        %v403 = vpop.f32.mrf.mxu0
        %v404 = vadd.f32 0.0, %v403
        %405 = vmatmul.f32.gmra.mxu0 %v361
        %v406 = vpop.f32.mrf.mxu0
        %v407 = vadd.f32 0.0, %v406
        %408 = vmatmul.f32.gmra.mxu0 %v362
        %v409 = vpop.f32.mrf.mxu0
        %v410 = vadd.f32 0.0, %v409
        %411 = vmatmul.f32.gmra.mxu0 %v363
        %v412 = vpop.f32.mrf.mxu0
        %v413 = vadd.f32 0.0, %v412
        %414 = vmatmul.f32.gmra.mxu0 %v364
        %v415 = vpop.f32.mrf.mxu0
        %v416 = vadd.f32 0.0, %v415
        %417 = vmatmul.f32.gmra.mxu0 %v365
        %v418 = vpop.f32.mrf.mxu0
        %v419 = vadd.f32 0.0, %v418
        %420 = vmatmul.f32.gmra.mxu0 %v366
        %v421 = vpop.f32.mrf.mxu0
        %v422 = vadd.f32 0.0, %v421
        %423 = vmatmul.f32.gmra.mxu0 %v367
        %v424 = vpop.f32.mrf.mxu0
        %v425 = vadd.f32 0.0, %v424
        %426 = vmatmul.f32.gmra.mxu0 %v368
        %v427 = vpop.f32.mrf.mxu0
        %v428 = vadd.f32 0.0, %v427
        %429 = vmatmul.f32.gmra.mxu0 %v369
        %v430 = vpop.f32.mrf.mxu0
        %v431 = vadd.f32 0.0, %v430
        %432 = vmatmul.f32.gmra.mxu0 %v370
        %v433 = vpop.f32.mrf.mxu0
        %v434 = vadd.f32 0.0, %v433
        %435 = vdwg.mxu0
        %v436 = vmax.f32 %v389, 0.0
        %v437 = vmax.f32 %v392, 0.0
        %v438 = vmax.f32 %v395, 0.0
        %v439 = vmax.f32 %v398, 0.0
        %v440 = vmax.f32 %v401, 0.0
        %v441 = vmax.f32 %v404, 0.0
        %v442 = vmax.f32 %v407, 0.0
        %v443 = vmax.f32 %v410, 0.0
        %v444 = vmax.f32 %v413, 0.0
        %v445 = vmax.f32 %v416, 0.0
        %v446 = vmax.f32 %v419, 0.0
        %v447 = vmax.f32 %v422, 0.0
        %v448 = vmax.f32 %v425, 0.0
        %v449 = vmax.f32 %v428, 0.0
        %v450 = vmax.f32 %v431, 0.0
        %v451 = vmax.f32 %v434, 0.0
        %s452 = scalar_lea.vmem %s1, 384
        %v453 = vld [vmem:[%s452] sm:$0xff]
        %v454 = vld [vmem:[%s452 + $0x8] sm:$0xff]
        %v455 = vld [vmem:[%s452 + $0x10] sm:$0xff]
        %v456 = vld [vmem:[%s452 + $0x18] sm:$0xff]
        %v457 = vld [vmem:[%s452 + $0x20] sm:$0xff]
        %v458 = vld [vmem:[%s452 + $0x28] sm:$0xff]
        %v459 = vld [vmem:[%s452 + $0x30] sm:$0xff]
        %v460 = vld [vmem:[%s452 + $0x38] sm:$0xff]
        %v461 = vld [vmem:[%s452 + $0x40] sm:$0xff]
        %v462 = vld [vmem:[%s452 + $0x48] sm:$0xff]
        %v463 = vld [vmem:[%s452 + $0x50] sm:$0xff]
        %v464 = vld [vmem:[%s452 + $0x58] sm:$0xff]
        %v465 = vld [vmem:[%s452 + $0x60] sm:$0xff]
        %v466 = vld [vmem:[%s452 + $0x68] sm:$0xff]
        %v467 = vld [vmem:[%s452 + $0x70] sm:$0xff]
        %v468 = vld [vmem:[%s452 + $0x78] sm:$0xff]
        %469 = vmatpush.msra.mxu0 %v451
        %470 = vmatpush.msra.mxu0 %v450
        %471 = vmatpush.msra.mxu0 %v449
        %472 = vmatpush.msra.mxu0 %v448
        %473 = vmatpush.msra.mxu0 %v447
        %474 = vmatpush.msra.mxu0 %v446
        %475 = vmatpush.msra.mxu0 %v445
        %476 = vmatpush.msra.mxu0 %v444
        %477 = vmatpush.msra.mxu0 %v443
        %478 = vmatpush.msra.mxu0 %v442
        %479 = vmatpush.msra.mxu0 %v441
        %480 = vmatpush.msra.mxu0 %v440
        %481 = vmatpush.msra.mxu0 %v439
        %482 = vmatpush.msra.mxu0 %v438
        %483 = vmatpush.msra.mxu0 %v437
        %484 = vmatpush.msra.mxu0 %v436
        %485 = vmatmul.f32.gmra.mxu0 %v453
        %v486 = vpop.f32.mrf.mxu0
        %v487 = vadd.f32 0.0, %v486
        %488 = vmatmul.f32.gmra.mxu0 %v454
        %v489 = vpop.f32.mrf.mxu0
        %v490 = vadd.f32 0.0, %v489
        %491 = vmatmul.f32.gmra.mxu0 %v455
        %v492 = vpop.f32.mrf.mxu0
        %v493 = vadd.f32 0.0, %v492
        %494 = vmatmul.f32.gmra.mxu0 %v456
        %v495 = vpop.f32.mrf.mxu0
        %v496 = vadd.f32 0.0, %v495
        %497 = vmatmul.f32.gmra.mxu0 %v457
        %v498 = vpop.f32.mrf.mxu0
        %v499 = vadd.f32 0.0, %v498
        %500 = vmatmul.f32.gmra.mxu0 %v458
        %v501 = vpop.f32.mrf.mxu0
        %v502 = vadd.f32 0.0, %v501
        %503 = vmatmul.f32.gmra.mxu0 %v459
        %v504 = vpop.f32.mrf.mxu0
        %v505 = vadd.f32 0.0, %v504
        %506 = vmatmul.f32.gmra.mxu0 %v460
        %v507 = vpop.f32.mrf.mxu0
        %v508 = vadd.f32 0.0, %v507
        %509 = vmatmul.f32.gmra.mxu0 %v461
        %v510 = vpop.f32.mrf.mxu0
        %v511 = vadd.f32 0.0, %v510
        %512 = vmatmul.f32.gmra.mxu0 %v462
        %v513 = vpop.f32.mrf.mxu0
        %v514 = vadd.f32 0.0, %v513
        %515 = vmatmul.f32.gmra.mxu0 %v463
        %v516 = vpop.f32.mrf.mxu0
        %517 = vmatmul.f32.gmra.mxu0 %v464
        %v518 = vpop.f32.mrf.mxu0
        %519 = vmatmul.f32.gmra.mxu0 %v465
        %v520 = vpop.f32.mrf.mxu0
        %521 = vmatmul.f32.gmra.mxu0 %v466
        %v522 = vpop.f32.mrf.mxu0
        %523 = vmatmul.f32.gmra.mxu0 %v467
        %v524 = vpop.f32.mrf.mxu0
        %525 = vmatmul.f32.gmra.mxu0 %v468
        %v526 = vpop.f32.mrf.mxu0
        %527 = vdwg.mxu0
        %v528 = vmul.f32 %v487, %v502
        %v529 = vmul.f32 %v490, %v505
        %v530 = vmul.f32 %v493, %v508
        %v531 = vmul.f32 %v496, %v511
        %v532 = vmul.f32 %v499, %v514
        %v533 = vadd.f32 %v528, %v529
        %v534 = vadd.f32 %v533, %v530
        %v535 = vadd.f32 %v534, %v531
        %v536 = vadd.f32 %v535, %v532
        %v537 = vrot.slane %v536, 4
        %v538 = vadd.f32 %v536, %v537
        %v539 = vrot.slane %v538, 2
        %v540 = vadd.f32 %v538, %v539
        %v541 = vrot.slane %v540, 1
        %v542 = vadd.f32 %v540, %v541
        %543 = vst [vmem:[%s136] sm:$0x1] %v542
        %s544 = sand.u32 %s71, 1
        %s545 = scalar_lea.sflag [#allocation3], %s544
        %s546 = sand.u32 %s71, 1
        %s547 = scalar_lea.vmem [#allocation2], %s546
        // Predicated region
        $region29: #{_lambda_.1} parent=27 // pred_check
          %p548 = pneg %p81
        $region30: #{_lambda_.1} parent=27 // pred_check_branch
          %550 = sbr.rel (%p548) target = $region32
        $region31: #{_lambda_.1} parent=27 // pred_region
          %552 = vsyncadd %s545, 0
          %s553 = scalar_lea.hbm %s2, %s16
          %s555 = sshll.u32 %s547, 4
          %s556 = int_to_ptr.vmem [resolvable:$true] %s555
          %s557 = sshll.u32 %s553, 4
          %s558 = int_to_ptr.hbm [resolvable:$true] %s557
          %560 = dma.vmem_to_hbm [thread:$0]  %s556, 16, %s558, %s545
        $region32: #{_lambda_.1} parent=27 // pred_fallthru
          _
      $region28: #{_lambda_.1} parent=5 // pred_fallthru
        _
      %p561 = scmp.le.s32.totalorder 2, %s11
      // Predicated region
      $region33: #{_lambda_.1} parent=5 // pred_check
        %p562 = pneg %p561
      $region34: #{_lambda_.1} parent=5 // pred_check_branch
        %564 = sbr.rel (%p562) target = $region36
      $region35: #{_lambda_.1} parent=5 // pred_region
        %s565 = ssub.s32 %s11, 2
        // Predicated region
        $region37: #{_lambda_.1} parent=35 // pred_check
          %p566 = pneg %p87
        $region38: #{_lambda_.1} parent=35 // pred_check_branch
          %568 = sbr.rel (%p566) target = $region40
        $region39: #{_lambda_.1} parent=35 // pred_region
          %s569 = sand.u32 %s72, 1
          %s570 = scalar_lea.sflag [#allocation3], %s569
          %s571 = sand.u32 %s72, 1
          %s572 = scalar_lea.vmem [#allocation2], %s571
          %574 = dma.done %s570, 16
        $region40: #{_lambda_.1} parent=35 // pred_fallthru
          _
      $region36: #{_lambda_.1} parent=5 // pred_fallthru
        _
    $region6: #{_lambda_.1} parent=1 // loop_footer
      %s15 = sadd.s32 1, %s11
    $region7: #{_lambda_.1} parent=1 // loop_footer_branch
      %10 = sbr.rel target = $region3
    $region8: #{_lambda_.1} parent=1 // loop_exit
      _
    %575 = vsyncpa [#allocation3], 1
    %s576 = scalar_lea.sflag [#allocation3], 1
    %577 = vsyncpa %s576, 1

</llo_original>
